<compile_context>
chip_gen: v5e
topology: v5e:2x2
jax: 0.10.0
libtpu: 0.0.40
codegen_flags: <defaults>
</compile_context>

<pallas_src>
import math

import jax
import jax.numpy as jnp
from jax.experimental import pallas as pl
from jax.experimental.pallas import tpu as pltpu


def _round_up(x, m):
    return (x + m - 1) // m * m


def lstm_cell_kernel(xh_ref, c_ref, w_ref, b_ref, h_out_ref, c_out_ref,
                     acc_ref):
    """One LSTM-cell step.

    Grid = (batch tiles ["parallel"], K tiles ["arbitrary"]).

    xh_ref   : (Bt, tk)    bf16 [x | h] tile (K-chunk)
    c_ref    : (Bt, Hp)    f32 previous cell state (gate-padded)
    w_ref    : (tk, 4*Hp)  bf16 stacked [w_ih_t; w_hh_t] K-chunk, gate-padded,
                           gate order [i | f | o | g]
    b_ref    : (1, 4*Hp)   f32 folded bias b_ih + b_hh, gate-padded
    acc_ref  : (Bt, 4*Hp)  f32 preactivation accumulator (VMEM scratch)
    """
    hp = c_ref.shape[-1]          # multiple of 128 -> lane-aligned gate slabs
    k = pl.program_id(1)

    @pl.when(k == 0)
    def _():
        acc_ref[...] = jnp.zeros_like(acc_ref)

    # bf16 x bf16 -> f32 accumulate on the MXU.
    acc_ref[...] += jnp.dot(xh_ref[...], w_ref[...],
                            preferred_element_type=jnp.float32)

    @pl.when(k == pl.num_programs(1) - 1)
    def _():
        preact = acc_ref[...] + b_ref[...]
        # One contiguous sigmoid slab [i|f|o] and one tanh slab [g] (EUP).
        sig = jax.nn.sigmoid(preact[:, :3 * hp])
        cellgate = jnp.tanh(preact[:, 3 * hp:])
        inputgate = sig[:, 0 * hp:1 * hp]
        forgetgate = sig[:, 1 * hp:2 * hp]
        outputgate = sig[:, 2 * hp:3 * hp]

        c_new = c_ref[...] * forgetgate + inputgate * cellgate
        h_out_ref[...] = (outputgate * jnp.tanh(c_new)).astype(h_out_ref.dtype)
        c_out_ref[...] = c_new.astype(c_out_ref.dtype)


@jax.jit
def lstm_cell_pallas(x, h, c, w_ih_t, w_hh_t, b_ih, b_hh):
    """Matches LSTMCell.forward: returns (h_new, (h_new, c_new))."""
    B, I = x.shape
    H = h.shape[-1]
    LANE, SUB = 128, 8
    f32, bf16 = jnp.float32, jnp.bfloat16

    Hp = _round_up(H, LANE)              # per-gate width, lane-aligned
    K = I + H

    # ---- batch tiling -----------------------------------------------------
    Bp0 = _round_up(B, SUB)
    if Bp0 <= SUB:
        block_b, Bp = Bp0, Bp0           # tiny batch: single tile, no grid work
    elif Bp0 <= 512:
        # Two tiles -> shards across v7x's 2 TensorCores; no-op on v5e/v6e.
        block_b = _round_up((Bp0 + 1) // 2, SUB)
        Bp = 2 * block_b
    else:
        block_b = 256                    # big batch: large lane/sublane-dense DMAs
        Bp = _round_up(Bp0, block_b)

    # ---- contraction (K) tiling: stream W once the bf16 weight is large ---
    TK = 512
    w_bytes_resident = K * 4 * Hp * 2    # bf16 stacked weight
    if w_bytes_resident > (8 << 20) and K > TK:
        Kp, tk = _round_up(K, TK), TK
    else:
        Kp, tk = K, K
    k_tiles = Kp // tk

    # ---- wrapper-side layout plumbing (data movement only, no compute) ----
    # Fuse the two linears and fold the biases.
    perm = jnp.array([0, 1, 3, 2])       # torch [i,f,g,o] -> kernel [i,f,o,g]
    w = jnp.concatenate([w_ih_t.astype(f32), w_hh_t.astype(f32)], axis=0)
    b = (b_ih + b_hh).astype(f32).reshape(1, 4 * H)
    # Reorder gates, pad each gate H -> Hp (lane alignment) and K -> Kp.
    w = w.reshape(K, 4, H)[:, perm, :]
    w = jnp.pad(w, ((0, Kp - K), (0, 0), (0, Hp - H)))
    w = w.reshape(Kp, 4 * Hp).astype(bf16)
    b = b.reshape(1, 4, H)[:, perm, :]
    b = jnp.pad(b, ((0, 0), (0, 0), (0, Hp - H))).reshape(1, 4 * Hp)  # f32
    # xh = [x | h], padded batch (sublanes) and K; cast to bf16 for the MXU.
    xh = jnp.concatenate([x.astype(f32), h.astype(f32)], axis=-1)
    xh = jnp.pad(xh, ((0, Bp - B), (0, Kp - K))).astype(bf16)
    # Cell state stays f32 (pad lanes are zeros -> stay zero through the cell
    # update since sigmoid(0)=0.5, tanh(0)=0).
    c_pad = jnp.pad(c.astype(f32), ((0, Bp - B), (0, Hp - H)))

    # ---- specs ------------------------------------------------------------
    if k_tiles == 1:
        # Constant index_map -> W fetched once; single-buffer it in VMEM.
        w_spec = pl.BlockSpec((tk, 4 * Hp), lambda i, k: (0, 0),
                              pipeline_mode=pl.Buffered(1))
    else:
        w_spec = pl.BlockSpec((tk, 4 * Hp), lambda i, k: (k, 0))
    b_spec = pl.BlockSpec((1, 4 * Hp), lambda i, k: (0, 0),
                          pipeline_mode=pl.Buffered(1))

    # VMEM budget estimate (double-buffered activations, streamed/resident W).
    n_w_buf = 1 if k_tiles == 1 else 2
    vmem_est = (2 * block_b * tk * 2            # xh (bf16)
                + 2 * block_b * Hp * 4          # c in
                + n_w_buf * tk * 4 * Hp * 2     # W (bf16)
                + 8 * 4 * Hp * 4                # bias (sublane-padded)
                + 4 * block_b * Hp * 4          # h_out + c_out
                + block_b * 4 * Hp * 4)         # accumulator scratch
    vmem_limit = int(min(max(vmem_est + (4 << 20), 32 << 20), 100 << 20))

    cost = pl.CostEstimate(
        flops=2 * Bp * Kp * 4 * Hp + 10 * Bp * Hp,
        transcendentals=5 * Bp * Hp,
        bytes_accessed=(xh.size * 2 + w.size * 2 + b.size * 4
                        + c_pad.size * 4 + 2 * Bp * Hp * 4),
    )

    grid = (Bp // block_b, k_tiles)
    h_pad, c_out = pl.pallas_call(
        lstm_cell_kernel,
        out_shape=(
            jax.ShapeDtypeStruct((Bp, Hp), f32),
            jax.ShapeDtypeStruct((Bp, Hp), f32),
        ),
        grid_spec=pltpu.PrefetchScalarGridSpec(
            num_scalar_prefetch=0,
            grid=grid,
            in_specs=[
                pl.BlockSpec((block_b, tk), lambda i, k: (i, k)),   # xh tile
                pl.BlockSpec((block_b, Hp), lambda i, k: (i, 0)),   # c tile
                w_spec,                                             # W
                b_spec,                                             # bias
            ],
            out_specs=(
                pl.BlockSpec((block_b, Hp), lambda i, k: (i, 0)),   # h_new
                pl.BlockSpec((block_b, Hp), lambda i, k: (i, 0)),   # c_new
            ),
            scratch_shapes=[pltpu.VMEM((block_b, 4 * Hp), f32)],
        ),
        compiler_params=pltpu.CompilerParams(
            dimension_semantics=("parallel", "arbitrary"),
            vmem_limit_bytes=vmem_limit),
        cost_estimate=cost,
        input_output_aliases={1: 1},   # reuse c's HBM buffer for c_new
    )(xh, c_pad, w, b)

    # Strip padding (cheap XLA slice; see TODO above for the scan-fused form).
    h_new = h_pad[:B, :H].astype(x.dtype)
    c_new = c_out[:B, :H].astype(c.dtype)
    return h_new, (h_new, c_new)


def lstm_cell_reference(x, h, c, w_ih_t, w_hh_t, b_ih, b_hh,
                        matmul_dtype=None):
    """Pure-JAX reference matching the PyTorch forward.

    matmul_dtype=None   -> full-f32 matmuls (Precision.HIGHEST).
    matmul_dtype=bf16   -> same bf16-input / f32-accumulate matmul the kernel
                           uses (tight check of the kernel logic).
    """
    if matmul_dtype is None:
        prec = jax.lax.Precision.HIGHEST
        preact = (jnp.dot(x, w_ih_t, precision=prec) + b_ih
                  + jnp.dot(h, w_hh_t, precision=prec) + b_hh)
    else:
        preact = (jnp.dot(x.astype(matmul_dtype), w_ih_t.astype(matmul_dtype),
                          preferred_element_type=jnp.float32) + b_ih
                  + jnp.dot(h.astype(matmul_dtype), w_hh_t.astype(matmul_dtype),
                            preferred_element_type=jnp.float32) + b_hh)
    i, f, g, o = jnp.split(preact, 4, axis=-1)
    i = jax.nn.sigmoid(i)
    f = jax.nn.sigmoid(f)
    g = jnp.tanh(g)
    o = jax.nn.sigmoid(o)
    c_new = c * f + i * g
    h_new = o * jnp.tanh(c_new)
    return h_new, (h_new, c_new)


def _make_case(key, batch, input_size, hidden_size):
    keys = jax.random.split(key, 7)
    std = 1.0 / math.sqrt(hidden_size)
    uniform = lambda k, shape: jax.random.uniform(
        k, shape, jnp.float32, -std, std)
    # Weights stored pre-transposed: (in, 4H) / (H, 4H); biases as (1, 4H).
    w_ih_t = uniform(keys[0], (input_size, 4 * hidden_size))
    w_hh_t = uniform(keys[1], (hidden_size, 4 * hidden_size))
    b_ih = uniform(keys[2], (1, 4 * hidden_size))
    b_hh = uniform(keys[3], (1, 4 * hidden_size))
    x = jax.random.normal(keys[4], (batch, input_size), jnp.float32)
    h0 = jax.random.normal(keys[5], (batch, hidden_size), jnp.float32)
    c0 = jax.random.normal(keys[6], (batch, hidden_size), jnp.float32)
    return (x, h0, c0, w_ih_t, w_hh_t, b_ih, b_hh)


def _check(args, tol_logic, tol_f32):
    h_out, (h_state, c_state) = lstm_cell_pallas(*args)
    jax.block_until_ready((h_out, h_state, c_state))

    # 1) Kernel-logic check vs a reference using the same bf16 matmul inputs
    #    (f32 accumulation) -> must match tightly.
    h_bf, (_, c_bf) = lstm_cell_reference(*args, matmul_dtype=jnp.bfloat16)
    assert jnp.allclose(h_out, h_bf, atol=tol_logic, rtol=tol_logic), \
        float(jnp.max(jnp.abs(h_out - h_bf)))
    assert jnp.allclose(c_state, c_bf, atol=tol_logic, rtol=tol_logic), \
        float(jnp.max(jnp.abs(c_state - c_bf)))

    # 2) End-to-end numerics vs a full-f32 reference (looser: the bf16 weight
    #    cast is the intended precision trade-off).
    h_f32, (_, c_f32) = lstm_cell_reference(*args)
    assert jnp.allclose(h_out, h_f32, atol=tol_f32, rtol=tol_f32), \
        float(jnp.max(jnp.abs(h_out - h_f32)))
    assert jnp.allclose(c_state, c_f32, atol=tol_f32, rtol=tol_f32), \
        float(jnp.max(jnp.abs(c_state - c_f32)))


if __name__ == "__main__":
    key = jax.random.PRNGKey(0)
    k_small, k_large = jax.random.split(key)

    # Small, module-consistent shapes -> single-tile, resident-weight path.
    _check(_make_case(k_small, batch=2, input_size=16, hidden_size=32),
           tol_logic=1e-3, tol_f32=5e-2)

    # Larger shapes -> streamed-K accumulator path + 2-tile "parallel" batch grid.
    _check(_make_case(k_large, batch=16, input_size=1024, hidden_size=1024),
           tol_logic=2e-3, tol_f32=1e-1)

    print("KERNEL_OK")
</pallas_src>

<mosaic_0001>
module attributes {stable_mosaic.version = 11 : i64} {
  func.func @lstm_cell_kernel(%arg0: i32, %arg1: i32, %arg2: memref<8x48xbf16, #tpu.memory_space<vmem>>, %arg3: memref<8x128xf32, #tpu.memory_space<vmem>>, %arg4: memref<48x512xbf16, #tpu.memory_space<vmem>>, %arg5: memref<1x512xf32, #tpu.memory_space<vmem>>, %arg6: memref<8x128xf32, #tpu.memory_space<vmem>>, %arg7: memref<8x128xf32, #tpu.memory_space<vmem>>, %arg8: memref<8x512xf32, #tpu.memory_space<vmem>>) attributes {dimension_semantics = [#tpu.dimension_semantics<parallel>, #tpu.dimension_semantics<arbitrary>], iteration_bounds = array<i64: 1, 1>, scalar_prefetch = 0 : i64, scratch_operands = 1 : i64, tpu.core_type = #tpu.core_type<tc>, window_params = [{transform_indices = @transform_0, window_bounds = array<i64: 8, 48>}, {transform_indices = @transform_1, window_bounds = array<i64: 8, 128>}, {pipeline_mode = #tpu.pipeline_mode<synchronous>, transform_indices = @transform_2, window_bounds = array<i64: 48, 512>}, {pipeline_mode = #tpu.pipeline_mode<synchronous>, transform_indices = @transform_3, window_bounds = array<i64: 1, 512>}, {transform_indices = @transform_4, window_bounds = array<i64: 8, 128>}, {transform_indices = @transform_5, window_bounds = array<i64: 8, 128>}]} {
    %c0_i32 = arith.constant 0 : i32
    %0 = arith.cmpi eq, %arg1, %c0_i32 : i32
    %1 = arith.extui %0 : i1 to i32
    %c0_i32_0 = arith.constant 0 : i32
    %2 = arith.cmpi ne, %1, %c0_i32_0 : i32
    scf.if %2 {
      %cst_10 = arith.constant 0.000000e+00 : f32
      %12 = vector.broadcast %cst_10 : f32 to vector<8x512xf32>
      %c0_11 = arith.constant 0 : index
      %c0_12 = arith.constant 0 : index
      %13 = vector.load %arg8[%c0_11, %c0_12] : memref<8x512xf32, #tpu.memory_space<vmem>>, vector<8x512xf32>
      tpu.vector_store %arg8[%c0_11, %c0_12], %12 {strides = array<i32>} : memref<8x512xf32, #tpu.memory_space<vmem>>, vector<8x512xf32>,
    } else {
    }
    %c0 = arith.constant 0 : index
    %c0_1 = arith.constant 0 : index
    %3 = vector.load %arg8[%c0, %c0_1] : memref<8x512xf32, #tpu.memory_space<vmem>>, vector<8x512xf32>
    %c0_2 = arith.constant 0 : index
    %c0_3 = arith.constant 0 : index
    %4 = vector.load %arg2[%c0_2, %c0_3] : memref<8x48xbf16, #tpu.memory_space<vmem>>, vector<8x48xbf16>
    %c0_4 = arith.constant 0 : index
    %c0_5 = arith.constant 0 : index
    %5 = vector.load %arg4[%c0_4, %c0_5] : memref<48x512xbf16, #tpu.memory_space<vmem>>, vector<48x512xbf16>
    %cst = arith.constant dense<0.000000e+00> : vector<8x512xf32>
    %6 = tpu.matmul %4, %5, %cst {dimension_numbers = #tpu.dot_dimension_numbers<[1], [0], [0], [1], [0, 0, 1, 1], [], []>} : vector<8x48xbf16>, vector<48x512xbf16>, vector<8x512xf32> -> vector<8x512xf32>
    %7 = arith.addf %3, %6 : vector<8x512xf32>
    %c0_6 = arith.constant 0 : index
    %c0_7 = arith.constant 0 : index
    %8 = vector.load %arg8[%c0_6, %c0_7] : memref<8x512xf32, #tpu.memory_space<vmem>>, vector<8x512xf32>
    tpu.vector_store %arg8[%c0_6, %c0_7], %7 {strides = array<i32>} : memref<8x512xf32, #tpu.memory_space<vmem>>, vector<8x512xf32>,
    %c0_i32_8 = arith.constant 0 : i32
    %9 = arith.cmpi eq, %arg1, %c0_i32_8 : i32
    %10 = arith.extui %9 : i1 to i32
    %c0_i32_9 = arith.constant 0 : i32
    %11 = arith.cmpi ne, %10, %c0_i32_9 : i32
    scf.if %11 {
      %c0_10 = arith.constant 0 : index
      %c0_11 = arith.constant 0 : index
      %12 = vector.load %arg8[%c0_10, %c0_11] : memref<8x512xf32, #tpu.memory_space<vmem>>, vector<8x512xf32>
      %c0_12 = arith.constant 0 : index
      %c0_13 = arith.constant 0 : index
      %13 = vector.load %arg5[%c0_12, %c0_13] : memref<1x512xf32, #tpu.memory_space<vmem>>, vector<1x512xf32>
      %14 = vector.broadcast %13 : vector<1x512xf32> to vector<8x512xf32>
      %15 = arith.addf %12, %14 : vector<8x512xf32>
      %16 = vector.extract_strided_slice %15 {offsets = [0, 0], sizes = [8, 384], strides = [1, 1]} : vector<8x512xf32> to vector<8x384xf32>
      %17 = arith.negf %16 : vector<8x384xf32>
      %18 = math.exp %17 : vector<8x384xf32>
      %cst_14 = arith.constant 1.000000e+00 : f32
      %19 = vector.broadcast %cst_14 : f32 to vector<8x384xf32>
      %20 = arith.addf %19, %18 : vector<8x384xf32>
      %21 = arith.divf %19, %20 : vector<8x384xf32>
      %22 = vector.extract_strided_slice %15 {offsets = [0, 384], sizes = [8, 128], strides = [1, 1]} : vector<8x512xf32> to vector<8x128xf32>
      %23 = math.tanh %22 : vector<8x128xf32>
      %24 = vector.extract_strided_slice %21 {offsets = [0, 0], sizes = [8, 128], strides = [1, 1]} : vector<8x384xf32> to vector<8x128xf32>
      %25 = vector.extract_strided_slice %21 {offsets = [0, 128], sizes = [8, 128], strides = [1, 1]} : vector<8x384xf32> to vector<8x128xf32>
      %26 = vector.extract_strided_slice %21 {offsets = [0, 256], sizes = [8, 128], strides = [1, 1]} : vector<8x384xf32> to vector<8x128xf32>
      %c0_15 = arith.constant 0 : index
      %c0_16 = arith.constant 0 : index
      %27 = vector.load %arg3[%c0_15, %c0_16] : memref<8x128xf32, #tpu.memory_space<vmem>>, vector<8x128xf32>
      %28 = arith.mulf %27, %25 : vector<8x128xf32>
      %29 = arith.mulf %24, %23 : vector<8x128xf32>
      %30 = arith.addf %28, %29 : vector<8x128xf32>
      %31 = math.tanh %30 : vector<8x128xf32>
      %32 = arith.mulf %26, %31 : vector<8x128xf32>
      %c0_17 = arith.constant 0 : index
      %c0_18 = arith.constant 0 : index
      %33 = vector.load %arg6[%c0_17, %c0_18] : memref<8x128xf32, #tpu.memory_space<vmem>>, vector<8x128xf32>
      tpu.vector_store %arg6[%c0_17, %c0_18], %32 {strides = array<i32>} : memref<8x128xf32, #tpu.memory_space<vmem>>, vector<8x128xf32>,
      %c0_19 = arith.constant 0 : index
      %c0_20 = arith.constant 0 : index
      %34 = vector.load %arg7[%c0_19, %c0_20] : memref<8x128xf32, #tpu.memory_space<vmem>>, vector<8x128xf32>
      tpu.vector_store %arg7[%c0_19, %c0_20], %30 {strides = array<i32>} : memref<8x128xf32, #tpu.memory_space<vmem>>, vector<8x128xf32>,
    } else {
    }
    return
  }
  func.func @transform_0(%arg0: i32, %arg1: i32) -> (i32, i32) {
    %c0_i32 = arith.constant 0 : i32
    return %arg0, %arg1 : i32, i32
  }
  func.func @transform_1(%arg0: i32, %arg1: i32) -> (i32, i32) {
    %c0_i32 = arith.constant 0 : i32
    %c0_i32_0 = arith.constant 0 : i32
    return %arg0, %c0_i32 : i32, i32
  }
  func.func @transform_2(%arg0: i32, %arg1: i32) -> (i32, i32) {
    %c0_i32 = arith.constant 0 : i32
    %c0_i32_0 = arith.constant 0 : i32
    %c0_i32_1 = arith.constant 0 : i32
    return %c0_i32, %c0_i32_0 : i32, i32
  }
  func.func @transform_3(%arg0: i32, %arg1: i32) -> (i32, i32) {
    %c0_i32 = arith.constant 0 : i32
    %c0_i32_0 = arith.constant 0 : i32
    %c0_i32_1 = arith.constant 0 : i32
    return %c0_i32, %c0_i32_0 : i32, i32
  }
  func.func @transform_4(%arg0: i32, %arg1: i32) -> (i32, i32) {
    %c0_i32 = arith.constant 0 : i32
    %c0_i32_0 = arith.constant 0 : i32
    return %arg0, %c0_i32 : i32, i32
  }
  func.func @transform_5(%arg0: i32, %arg1: i32) -> (i32, i32) {
    %c0_i32 = arith.constant 0 : i32
    %c0_i32_0 = arith.constant 0 : i32
    return %arg0, %c0_i32 : i32, i32
  }
}

</mosaic_0001>

<llo_original>
// kernel: lstm_cell_pallas.1
$region0: #{lstm_cell_pallas.1}
  #allocation0 [shape = 'u32[]', space=smem, size = 0x4, offset = 0x4, fixed_abs, tag = 'smem constant byte address 0x4 - core index']
  #allocation1 [shape = 'u32[72,128]{1,0:T(1,128)}', space=vmem, size = 0x9000, scoped, tag = 'internal scratch']
  #allocation2 [shape = 'f32[8,512]{1,0:T(8,128)}', space=vmem, size = 0x4000, scoped, tag = 'scratch operand']
  %s0 = inlined_call_operand.vmem [shape: bf16[8,48], index: 0, kind: input, shape index: {}]
  %s1 = inlined_call_operand.vmem [shape: f32[8,128], index: 1, kind: input, shape index: {}, may-alias: {1,5}]
  %s2 = inlined_call_operand.vmem [shape: bf16[48,512], index: 2, kind: input, shape index: {}]
  %s3 = inlined_call_operand.vmem [shape: f32[1,512], index: 3, kind: input, shape index: {}]
  %s4 = inlined_call_operand.vmem [shape: f32[8,128], index: 4, kind: output, shape index: {0}]
  %s5 = inlined_call_operand.vmem [shape: f32[8,128], index: 5, kind: output, shape index: {1}, may-alias: {1,5}]
  %6 = xla_tuple %s4, %s5
  %s7 = sld [smem:[#allocation0]]
  $region42: #{lstm_cell_pallas.1} parent=0
    _
  %s9 = ssub.s32 1, %s7
  %s10 = scalar_select 0, %s9, %s7
  // Predicated region
  $region2: #{lstm_cell_pallas.1} parent=0 // pred_check
    _
  $region3: #{lstm_cell_pallas.1} parent=0 // pred_check_branch
    %12 = sbr.rel (0) target = $region5
  $region4: #{lstm_cell_pallas.1} parent=0 // pred_region
    _
  $region5: #{lstm_cell_pallas.1} parent=0 // pred_fallthru
    _
  // Predicated region
  $region6: #{lstm_cell_pallas.1} parent=0 // pred_check
    _
  $region7: #{lstm_cell_pallas.1} parent=0 // pred_check_branch
    %14 = sbr.rel (0) target = $region9
  $region8: #{lstm_cell_pallas.1} parent=0 // pred_region
    _
  $region9: #{lstm_cell_pallas.1} parent=0 // pred_fallthru
    _
  // Predicated region
  $region10: #{lstm_cell_pallas.1} parent=0 // pred_check
    _
  $region11: #{lstm_cell_pallas.1} parent=0 // pred_check_branch
    %16 = sbr.rel (0) target = $region13
  $region12: #{lstm_cell_pallas.1} parent=0 // pred_region
    _
  $region13: #{lstm_cell_pallas.1} parent=0 // pred_fallthru
    _
  // Predicated region
  $region14: #{lstm_cell_pallas.1} parent=0 // pred_check
    _
  $region15: #{lstm_cell_pallas.1} parent=0 // pred_check_branch
    %18 = sbr.rel (0) target = $region17
  $region16: #{lstm_cell_pallas.1} parent=0 // pred_region
    _
  $region17: #{lstm_cell_pallas.1} parent=0 // pred_fallthru
    _
  %p20 = scmp.eq.s32.totalorder 0, 0
  // Predicated region
  $region18: #{lstm_cell_pallas.1} parent=0 // pred_check
    %p21 = pneg %p20
  $region19: #{lstm_cell_pallas.1} parent=0 // pred_check_branch
    %23 = sbr.rel (%p21) target = $region21
  $region20: #{lstm_cell_pallas.1} parent=0 // pred_region
    %24 = vst [vmem:[#allocation2] sm:$0xff] 0.0
    %25 = vst [vmem:[#allocation2 + $0x8] sm:$0xff] 0.0
    %26 = vst [vmem:[#allocation2 + $0x10] sm:$0xff] 0.0
    %27 = vst [vmem:[#allocation2 + $0x18] sm:$0xff] 0.0
  $region21: #{lstm_cell_pallas.1} parent=0 // pred_fallthru
    _
  %v28 = vld [vmem:[#allocation2] sm:$0xff]
  %v29 = vld [vmem:[#allocation2 + $0x8] sm:$0xff]
  %v30 = vld [vmem:[#allocation2 + $0x10] sm:$0xff]
  %v31 = vld [vmem:[#allocation2 + $0x18] sm:$0xff]
  %v32 = vld [vmem:[%s0] sm:$0xf]
  %v33 = vld [vmem:[%s2] sm:$0xff]
  %v34 = vld [vmem:[%s2 + $0x8] sm:$0xff]
  %v35 = vld [vmem:[%s2 + $0x10] sm:$0xff]
  %v36 = vld [vmem:[%s2 + $0x18] sm:$0xff]
  %v37 = vld [vmem:[%s2 + $0x20] sm:$0xff]
  %v38 = vld [vmem:[%s2 + $0x28] sm:$0xff]
  %v39 = vld [vmem:[%s2 + $0x30] sm:$0xff]
  %v40 = vld [vmem:[%s2 + $0x38] sm:$0xff]
  %v41 = vld [vmem:[%s2 + $0x40] sm:$0xff]
  %v42 = vld [vmem:[%s2 + $0x48] sm:$0xff]
  %v43 = vld [vmem:[%s2 + $0x50] sm:$0xff]
  %v44 = vld [vmem:[%s2 + $0x58] sm:$0xff]
  %v57 = vunpack.c.l.b16 %v33
  %v58 = vunpack.c.h.b16 %v33
  %v59 = vunpack.c.l.b16 %v34
  %v60 = vunpack.c.h.b16 %v34
  %v61 = vunpack.c.l.b16 %v35
  %v62 = vunpack.c.h.b16 %v35
  %v63 = vunpack.c.l.b16 %v36
  %v64 = vunpack.c.h.b16 %v36
  %v65 = vunpack.c.l.b16 %v37
  %v66 = vunpack.c.h.b16 %v37
  %v67 = vunpack.c.l.b16 %v38
  %v68 = vunpack.c.h.b16 %v38
  %v69 = vunpack.c.l.b16 %v39
  %v70 = vunpack.c.h.b16 %v39
  %v71 = vunpack.c.l.b16 %v40
  %v72 = vunpack.c.h.b16 %v40
  %v73 = vunpack.c.l.b16 %v41
  %v74 = vunpack.c.h.b16 %v41
  %v75 = vunpack.c.l.b16 %v42
  %v76 = vunpack.c.h.b16 %v42
  %v77 = vunpack.c.l.b16 %v43
  %v78 = vunpack.c.h.b16 %v43
  %v79 = vunpack.c.l.b16 %v44
  %v80 = vunpack.c.h.b16 %v44
  %v81 = vpack.c.b16 %v61, %v57
  %v82 = vpack.c.b16 %v62, %v58
  %v83 = vpack.c.b16 %v63, %v59
  %v84 = vpack.c.b16 %v64, %v60
  %v85 = vpack.c.b16 %v69, %v65
  %v86 = vpack.c.b16 %v70, %v66
  %v87 = vpack.c.b16 %v71, %v67
  %v88 = vpack.c.b16 %v72, %v68
  %v89 = vpack.c.b16 %v77, %v73
  %v90 = vpack.c.b16 %v78, %v74
  %v91 = vpack.c.b16 %v79, %v75
  %v92 = vpack.c.b16 %v80, %v76
  %vm105 = vcmask 392192
  %v107 = vsel %vm105, %v32, 0
  %109 = vmatpush.bf16.msra.mxu0 0
  %110 = vmatpush.bf16.msra.mxu0 0
  %111 = vmatpush.bf16.msra.mxu0 0
  %112 = vmatpush.bf16.msra.mxu0 0
  %113 = vmatpush.bf16.msra.mxu0 0
  %114 = vmatpush.bf16.msra.mxu0 %v89
  %115 = vmatpush.bf16.msra.mxu0 %v85
  %116 = vmatpush.bf16.msra.mxu0 %v81
  %117 = vmatmul.bf16.gmra.mxu0 %v107
  %v118 = vpop.f32.mrf.mxu0
  %v119 = vadd.f32 0.0, %v118
  %v120 = vpop.f32.mrf.mxu0
  %121 = vdwg.mxu0
  %122 = vmatpush.bf16.msra.mxu0 0
  %123 = vmatpush.bf16.msra.mxu0 0
  %124 = vmatpush.bf16.msra.mxu0 0
  %125 = vmatpush.bf16.msra.mxu0 0
  %126 = vmatpush.bf16.msra.mxu0 0
  %127 = vmatpush.bf16.msra.mxu0 %v90
  %128 = vmatpush.bf16.msra.mxu0 %v86
  %129 = vmatpush.bf16.msra.mxu0 %v82
  %130 = vmatmul.bf16.gmra.mxu0 %v107
  %v131 = vpop.f32.mrf.mxu0
  %v132 = vadd.f32 0.0, %v131
  %v133 = vpop.f32.mrf.mxu0
  %134 = vdwg.mxu0
  %135 = vmatpush.bf16.msra.mxu0 0
  %136 = vmatpush.bf16.msra.mxu0 0
  %137 = vmatpush.bf16.msra.mxu0 0
  %138 = vmatpush.bf16.msra.mxu0 0
  %139 = vmatpush.bf16.msra.mxu0 0
  %140 = vmatpush.bf16.msra.mxu0 %v91
  %141 = vmatpush.bf16.msra.mxu0 %v87
  %142 = vmatpush.bf16.msra.mxu0 %v83
  %143 = vmatmul.bf16.gmra.mxu0 %v107
  %v144 = vpop.f32.mrf.mxu0
  %v145 = vadd.f32 0.0, %v144
  %v146 = vpop.f32.mrf.mxu0
  %147 = vdwg.mxu0
  %148 = vmatpush.bf16.msra.mxu0 0
  %149 = vmatpush.bf16.msra.mxu0 0
  %150 = vmatpush.bf16.msra.mxu0 0
  %151 = vmatpush.bf16.msra.mxu0 0
  %152 = vmatpush.bf16.msra.mxu0 0
  %153 = vmatpush.bf16.msra.mxu0 %v92
  %154 = vmatpush.bf16.msra.mxu0 %v88
  %155 = vmatpush.bf16.msra.mxu0 %v84
  %156 = vmatmul.bf16.gmra.mxu0 %v107
  %v157 = vpop.f32.mrf.mxu0
  %v158 = vadd.f32 0.0, %v157
  %v159 = vpop.f32.mrf.mxu0
  %160 = vdwg.mxu0
  %v161 = vadd.f32 %v28, %v119
  %v162 = vadd.f32 %v29, %v132
  %v163 = vadd.f32 %v30, %v145
  %v164 = vadd.f32 %v31, %v158
  %165 = vst [vmem:[#allocation2] sm:$0xff] %v161
  %166 = vst [vmem:[#allocation2 + $0x8] sm:$0xff] %v162
  %167 = vst [vmem:[#allocation2 + $0x10] sm:$0xff] %v163
  %168 = vst [vmem:[#allocation2 + $0x18] sm:$0xff] %v164
  // Predicated region
  $region22: #{lstm_cell_pallas.1} parent=0 // pred_check
    %p169 = pneg %p20
  $region23: #{lstm_cell_pallas.1} parent=0 // pred_check_branch
    %171 = sbr.rel (%p169) target = $region25
  $region24: #{lstm_cell_pallas.1} parent=0 // pred_region
    %v172 = vld [vmem:[#allocation2] sm:$0xff]
    %v173 = vld [vmem:[#allocation2 + $0x8] sm:$0xff]
    %v174 = vld [vmem:[#allocation2 + $0x10] sm:$0xff]
    %v175 = vld [vmem:[#allocation2 + $0x18] sm:$0xff]
    %v176 = vld [vmem:[%s3] sm:$0xf]
    %v178 = vperm.slane %v176, 0
    %v179 = vperm.slane %v176, 1
    %v180 = vperm.slane %v176, 2
    %v181 = vperm.slane %v176, 3
    %v186 = vadd.f32 %v172, %v178
    %v187 = vadd.f32 %v173, %v179
    %v188 = vadd.f32 %v174, %v180
    %v189 = vadd.f32 %v175, %v181
    %v190 = vxor.u32 %v186, 2147483648
    %v191 = vxor.u32 %v187, 2147483648
    %v192 = vxor.u32 %v188, 2147483648
    %v193 = vmul.f32 %v190, 1.442695
    %v194 = vpow.pop %v193
    %v195 = vmul.f32 %v191, 1.442695
    %v196 = vpow.pop %v195
    %v197 = vmul.f32 %v192, 1.442695
    %v198 = vpow.pop %v197
    %v199 = vadd.f32 %v194, 1.0
    %v200 = vadd.f32 %v196, 1.0
    %v201 = vadd.f32 %v198, 1.0
    %v202 = vrcp.pop %v199
    %v203 = vmul.f32 %v199, %v202
    %v204 = vsub.f32 1.0, %v203
    %v205 = vmul.f32 %v202, %v204
    %v206 = vadd.f32 %v202, %v205
    %vm207 = vweird.f32 %v199
    %vm208 = vweird.f32 %v202
    %vm209 = vmor %vm207, %vm208
    %v210 = vsel %vm209, %v202, %v206
    %v211 = vand.u32 2147483647, %v199
    %vm212 = vcmp.eq.f32.partialorder %v211, 8.507059e+37
    %v213 = vand.u32 %v199, 2147483648
    %v214 = vor.u32 1.1754944e-38, %v213
    %v215 = vsel %vm212, %v214, %v210
    %v216 = vmul.f32 1.0, %v215
    %v217 = vrcp.pop %v200
    %v218 = vmul.f32 %v200, %v217
    %v219 = vsub.f32 1.0, %v218
    %v220 = vmul.f32 %v217, %v219
    %v221 = vadd.f32 %v217, %v220
    %vm222 = vweird.f32 %v200
    %vm223 = vweird.f32 %v217
    %vm224 = vmor %vm222, %vm223
    %v225 = vsel %vm224, %v217, %v221
    %v226 = vand.u32 2147483647, %v200
    %vm227 = vcmp.eq.f32.partialorder %v226, 8.507059e+37
    %v228 = vand.u32 %v200, 2147483648
    %v229 = vor.u32 1.1754944e-38, %v228
    %v230 = vsel %vm227, %v229, %v225
    %v231 = vmul.f32 1.0, %v230
    %v232 = vrcp.pop %v201
    %v233 = vmul.f32 %v201, %v232
    %v234 = vsub.f32 1.0, %v233
    %v235 = vmul.f32 %v232, %v234
    %v236 = vadd.f32 %v232, %v235
    %vm237 = vweird.f32 %v201
    %vm238 = vweird.f32 %v232
    %vm239 = vmor %vm237, %vm238
    %v240 = vsel %vm239, %v232, %v236
    %v241 = vand.u32 2147483647, %v201
    %vm242 = vcmp.eq.f32.partialorder %v241, 8.507059e+37
    %v243 = vand.u32 %v201, 2147483648
    %v244 = vor.u32 1.1754944e-38, %v243
    %v245 = vsel %vm242, %v244, %v240
    %v246 = vmul.f32 1.0, %v245
    %v247 = vtanh.pop %v189
    %v248 = vld [vmem:[%s1] sm:$0xff]
    %v249 = vmul.f32 %v248, %v231
    %v250 = vmul.f32 %v216, %v247
    %v251 = vadd.f32 %v249, %v250
    %v252 = vtanh.pop %v251
    %v253 = vmul.f32 %v246, %v252
    %254 = vst [vmem:[%s4] sm:$0xff] %v253
    %255 = vst [vmem:[%s5] sm:$0xff] %v251
  $region25: #{lstm_cell_pallas.1} parent=0 // pred_fallthru
    _
  // Predicated region
  $region26: #{lstm_cell_pallas.1} parent=0 // pred_check
    _
  $region27: #{lstm_cell_pallas.1} parent=0 // pred_check_branch
    %257 = sbr.rel (0) target = $region29
  $region28: #{lstm_cell_pallas.1} parent=0 // pred_region
    _
  $region29: #{lstm_cell_pallas.1} parent=0 // pred_fallthru
    _
  // Predicated region
  $region30: #{lstm_cell_pallas.1} parent=0 // pred_check
    _
  $region31: #{lstm_cell_pallas.1} parent=0 // pred_check_branch
    %259 = sbr.rel (0) target = $region33
  $region32: #{lstm_cell_pallas.1} parent=0 // pred_region
    _
  $region33: #{lstm_cell_pallas.1} parent=0 // pred_fallthru
    _
  // Predicated region
  $region34: #{lstm_cell_pallas.1} parent=0 // pred_check
    _
  $region35: #{lstm_cell_pallas.1} parent=0 // pred_check_branch
    %261 = sbr.rel (0) target = $region37
  $region36: #{lstm_cell_pallas.1} parent=0 // pred_region
    _
  $region37: #{lstm_cell_pallas.1} parent=0 // pred_fallthru
    _
  // Predicated region
  $region38: #{lstm_cell_pallas.1} parent=0 // pred_check
    _
  $region39: #{lstm_cell_pallas.1} parent=0 // pred_check_branch
    %263 = sbr.rel (0) target = $region41
  $region40: #{lstm_cell_pallas.1} parent=0 // pred_region
    _
  $region41: #{lstm_cell_pallas.1} parent=0 // pred_fallthru
    _

</llo_original>
